<compile_context>
chip_gen: v6e
topology: v6e:2x2x1
jax: 0.10.0
libtpu: 0.0.40
codegen_flags: <defaults>
</compile_context>

<pallas_src>
import functools

import jax
import jax.numpy as jnp
from jax import lax
from jax.experimental import pallas as pl
from jax.experimental.pallas import tpu as pltpu


def _round_up(x, m):
    return (x + m - 1) // m * m


def cbow_kernel(ctx_smem, emb_ref, w_ref, b_ref, out_ref, avg_ref, *, winlen):
    # ctx_smem : SMEM [Bp*W]   int32  (scalar-prefetched, flattened context ids)
    # emb_ref  : VMEM [V,  Dp] f32    (full embedding table, grid-invariant block)
    # w_ref    : VMEM [TN, Dp] bf16   (one vocab tile of the fc weight)
    # b_ref    : VMEM [1,  TN] f32    (one vocab tile of the fc bias)
    # out_ref  : VMEM [TB, TN] f32    (one (batch, vocab) tile of the logits)
    # avg_ref  : VMEM [TB, Dp] f32    (scratch: window-averaged embeddings)
    i = pl.program_id(0)          # batch tile
    j = pl.program_id(1)          # vocab tile
    TB = out_ref.shape[0]
    inv_w = 1.0 / winlen

    # Gather + mean once per batch tile; cached in avg_ref across vocab tiles.
    @pl.when(j == 0)
    def _():
        def gather_row(b, carry):
            base = (i * TB + b) * winlen
            acc = emb_ref[pl.ds(ctx_smem[base], 1), :]              # [1, Dp]
            for t in range(1, winlen):                              # W is small & static
                acc = acc + emb_ref[pl.ds(ctx_smem[base + t], 1), :]
            avg_ref[pl.ds(b, 1), :] = acc * inv_w                   # scale the [1,D] row
            return carry

        lax.fori_loop(0, TB, gather_row, 0)

    # logits tile = avg @ W_fc[j].T + b[j]   (MXU: bf16 inputs, f32 accumulate)
    logits = lax.dot_general(
        avg_ref[...].astype(jnp.bfloat16), w_ref[...],
        dimension_numbers=(((1,), (1,)), ((), ())),
        preferred_element_type=jnp.float32,
    )                                                               # [TB, TN]
    out_ref[...] = logits + b_ref[...]


def cbow_forward(context, emb_weights, fc_weight, fc_bias, *,
                 block_b=128, block_v=512):
    """context: [B, W] int; emb_weights: [V, D]; fc_weight: [V, D]; fc_bias: [V]."""
    B, W = context.shape
    V, D = emb_weights.shape

    # Lane-dense padding of the feature dim and the (output) vocab dim.
    Dp = _round_up(D, 128)
    TN = min(_round_up(V, 128), _round_up(block_v, 128))   # vocab tile
    Vp = _round_up(V, TN)

    # Batch tile: multiple of 8 sublanes, default 128; split into >=2 tiles when
    # possible so v7x's second TensorCore gets work on the "parallel" axis.
    TB = min(_round_up(B, 8), _round_up(block_b, 8))
    if B > 8 and _round_up(B, TB) // TB < 2:
        TB = _round_up((B + 1) // 2, 8)
    Bp = _round_up(B, TB)

    # Clamp untrusted indices (VMEM reads have no runtime OOB check), pad the
    # batch, flatten to 1-D for SMEM scalar prefetch (avoids 2-D SMEM padding).
    ctx = jnp.clip(context.astype(jnp.int32), 0, V - 1)
    ctx = jnp.pad(ctx, ((0, Bp - B), (0, 0))).reshape(-1)            # [Bp*W]

    emb_p = jnp.pad(emb_weights.astype(jnp.float32), ((0, 0), (0, Dp - D)))
    w_p = jnp.pad(fc_weight.astype(jnp.bfloat16), ((0, Vp - V), (0, Dp - D)))
    b_p = jnp.pad(fc_bias.astype(jnp.float32), (0, Vp - V)).reshape(1, Vp)

    grid = (Bp // TB, Vp // TN)

    # Resident set: emb block (2x buffered), per-step weight/bias/out tiles (2x),
    # avg scratch. Sized explicitly so larger shapes don't trip the default
    # scoped-VMEM limits (16 MiB v5e / 32 MiB v6e/v7x).
    vmem_needed = (2 * emb_p.size * 4 + 2 * TN * Dp * 2 + 2 * TN * 4
                   + 2 * TB * TN * 4 + TB * Dp * 4)
    vmem_limit = int(min(100 * 2**20, max(vmem_needed + (2 << 20), 16 << 20)))

    cost = pl.CostEstimate(
        flops=2 * Bp * Vp * Dp          # avg @ fc.T
              + Bp * W * Dp             # gather accumulation
              + Bp * Vp,                # bias add
        transcendentals=0,
        bytes_accessed=(ctx.size * 4 + emb_p.size * 4 + w_p.size * 2
                        + b_p.size * 4 + Bp * Vp * 4 + Bp * W * Dp * 4),
    )

    out = pl.pallas_call(
        functools.partial(cbow_kernel, winlen=W),
        out_shape=jax.ShapeDtypeStruct((Bp, Vp), jnp.float32),
        grid_spec=pltpu.PrefetchScalarGridSpec(
            num_scalar_prefetch=1,
            grid=grid,
            in_specs=[
                # Embedding table: grid-invariant block (DMA'd once, stays resident).
                pl.BlockSpec((emb_p.shape[0], Dp), lambda i, j, c: (0, 0)),
                # fc weight / bias: tiled along the output vocab axis.
                pl.BlockSpec((TN, Dp), lambda i, j, c: (j, 0)),
                pl.BlockSpec((1, TN), lambda i, j, c: (0, j)),
            ],
            out_specs=pl.BlockSpec((TB, TN), lambda i, j, c: (i, j)),
            scratch_shapes=[pltpu.VMEM((TB, Dp), jnp.float32)],
        ),
        compiler_params=pltpu.CompilerParams(
            dimension_semantics=("parallel", "arbitrary"),
            vmem_limit_bytes=vmem_limit,
        ),
        cost_estimate=cost,
    )(ctx, emb_p, w_p, b_p)

    return out[:B, :V]


if __name__ == "__main__":
    # Small, deterministic setup consistent with the module's __init__.
    vocab_size, embedding_dim, winlen, batch = 64, 32, 8, 4

    key = jax.random.PRNGKey(0)
    k_emb, k_w, k_b, k_ctx = jax.random.split(key, 4)

    # embedding_weights = randn(V, D) * (1 / sqrt(D))
    emb_weights = (jax.random.normal(k_emb, (vocab_size, embedding_dim),
                                     dtype=jnp.float32)
                   * (1.0 / embedding_dim ** 0.5))
    # nn.Linear(D, V): weight [V, D], bias [V], uniform(-1/sqrt(D), 1/sqrt(D))
    bound = 1.0 / (embedding_dim ** 0.5)
    fc_weight = jax.random.uniform(k_w, (vocab_size, embedding_dim),
                                   dtype=jnp.float32, minval=-bound, maxval=bound)
    fc_bias = jax.random.uniform(k_b, (vocab_size,),
                                 dtype=jnp.float32, minval=-bound, maxval=bound)

    context = jax.random.randint(k_ctx, (batch, winlen), 0, vocab_size,
                                 dtype=jnp.int32)

    out = cbow_forward(context, emb_weights, fc_weight, fc_bias)
    out = jax.block_until_ready(out)

    # Pure-JAX reference of the same forward pass.
    ref = emb_weights[context].mean(axis=1) @ fc_weight.T + fc_bias
    assert out.shape == (batch, vocab_size)
    # bf16 MXU operands for the fc matmul -> slightly looser tolerance.
    assert jnp.allclose(out, ref, atol=3e-3, rtol=3e-3), "mismatch vs reference"

    print("KERNEL_OK")
</pallas_src>

<mosaic_0001>
module attributes {stable_mosaic.version = 11 : i64} {
  func.func @cbow_kernel(%arg0: i32, %arg1: i32, %arg2: memref<64xi32, #tpu.memory_space<smem>>, %arg3: memref<64x128xf32, #tpu.memory_space<vmem>>, %arg4: memref<128x128xbf16, #tpu.memory_space<vmem>>, %arg5: memref<1x128xf32, #tpu.memory_space<vmem>>, %arg6: memref<8x128xf32, #tpu.memory_space<vmem>>, %arg7: memref<8x128xf32, #tpu.memory_space<vmem>>) attributes {dimension_semantics = [#tpu.dimension_semantics<parallel>, #tpu.dimension_semantics<arbitrary>], iteration_bounds = array<i64: 1, 1>, scalar_prefetch = 1 : i64, scratch_operands = 1 : i64, tpu.core_type = #tpu.core_type<tc>, window_params = [{pipeline_mode = #tpu.pipeline_mode<synchronous>, transform_indices = @transform_0, window_bounds = array<i64: 64, 128>}, {transform_indices = @transform_1, window_bounds = array<i64: 128, 128>}, {transform_indices = @transform_2, window_bounds = array<i64: 1, 128>}, {transform_indices = @transform_3, window_bounds = array<i64: 8, 128>}]} {
    %c0_i32 = arith.constant 0 : i32
    %0 = arith.cmpi eq, %arg1, %c0_i32 : i32
    %1 = arith.extui %0 : i1 to i32
    %c0_i32_0 = arith.constant 0 : i32
    %2 = arith.cmpi ne, %1, %c0_i32_0 : i32
    scf.if %2 {
      %c0_i32_8 = arith.constant 0 : i32
      %c8_i32 = arith.constant 8 : i32
      %11 = arith.addi %c0_i32_8, %c8_i32 : i32
      %c1_i32 = arith.constant 1 : i32
      scf.for %arg8 = %c0_i32_8 to %11 step %c1_i32  : i32 {
        %c8_i32_10 = arith.constant 8 : i32
        %12 = arith.muli %arg0, %c8_i32_10 : i32
        %13 = arith.addi %12, %arg8 : i32
        %c8_i32_11 = arith.constant 8 : i32
        %14 = arith.muli %13, %c8_i32_11 : i32
        %15 = arith.index_cast %14 : i32 to index
        %16 = memref.load %arg2[%15] : memref<64xi32, #tpu.memory_space<smem>>
        %17 = arith.index_cast %16 : i32 to index
        %c0_12 = arith.constant 0 : index
        %18 = vector.load %arg3[%17, %c0_12] : memref<64x128xf32, #tpu.memory_space<vmem>>, vector<1x128xf32>
        %c1_i32_13 = arith.constant 1 : i32
        %19 = arith.addi %14, %c1_i32_13 : i32
        %20 = arith.index_cast %19 : i32 to index
        %21 = memref.load %arg2[%20] : memref<64xi32, #tpu.memory_space<smem>>
        %22 = arith.index_cast %21 : i32 to index
        %c0_14 = arith.constant 0 : index
        %23 = vector.load %arg3[%22, %c0_14] : memref<64x128xf32, #tpu.memory_space<vmem>>, vector<1x128xf32>
        %24 = arith.addf %18, %23 : vector<1x128xf32>
        %c2_i32 = arith.constant 2 : i32
        %25 = arith.addi %14, %c2_i32 : i32
        %26 = arith.index_cast %25 : i32 to index
        %27 = memref.load %arg2[%26] : memref<64xi32, #tpu.memory_space<smem>>
        %28 = arith.index_cast %27 : i32 to index
        %c0_15 = arith.constant 0 : index
        %29 = vector.load %arg3[%28, %c0_15] : memref<64x128xf32, #tpu.memory_space<vmem>>, vector<1x128xf32>
        %30 = arith.addf %24, %29 : vector<1x128xf32>
        %c3_i32 = arith.constant 3 : i32
        %31 = arith.addi %14, %c3_i32 : i32
        %32 = arith.index_cast %31 : i32 to index
        %33 = memref.load %arg2[%32] : memref<64xi32, #tpu.memory_space<smem>>
        %34 = arith.index_cast %33 : i32 to index
        %c0_16 = arith.constant 0 : index
        %35 = vector.load %arg3[%34, %c0_16] : memref<64x128xf32, #tpu.memory_space<vmem>>, vector<1x128xf32>
        %36 = arith.addf %30, %35 : vector<1x128xf32>
        %c4_i32 = arith.constant 4 : i32
        %37 = arith.addi %14, %c4_i32 : i32
        %38 = arith.index_cast %37 : i32 to index
        %39 = memref.load %arg2[%38] : memref<64xi32, #tpu.memory_space<smem>>
        %40 = arith.index_cast %39 : i32 to index
        %c0_17 = arith.constant 0 : index
        %41 = vector.load %arg3[%40, %c0_17] : memref<64x128xf32, #tpu.memory_space<vmem>>, vector<1x128xf32>
        %42 = arith.addf %36, %41 : vector<1x128xf32>
        %c5_i32 = arith.constant 5 : i32
        %43 = arith.addi %14, %c5_i32 : i32
        %44 = arith.index_cast %43 : i32 to index
        %45 = memref.load %arg2[%44] : memref<64xi32, #tpu.memory_space<smem>>
        %46 = arith.index_cast %45 : i32 to index
        %c0_18 = arith.constant 0 : index
        %47 = vector.load %arg3[%46, %c0_18] : memref<64x128xf32, #tpu.memory_space<vmem>>, vector<1x128xf32>
        %48 = arith.addf %42, %47 : vector<1x128xf32>
        %c6_i32 = arith.constant 6 : i32
        %49 = arith.addi %14, %c6_i32 : i32
        %50 = arith.index_cast %49 : i32 to index
        %51 = memref.load %arg2[%50] : memref<64xi32, #tpu.memory_space<smem>>
        %52 = arith.index_cast %51 : i32 to index
        %c0_19 = arith.constant 0 : index
        %53 = vector.load %arg3[%52, %c0_19] : memref<64x128xf32, #tpu.memory_space<vmem>>, vector<1x128xf32>
        %54 = arith.addf %48, %53 : vector<1x128xf32>
        %c7_i32 = arith.constant 7 : i32
        %55 = arith.addi %14, %c7_i32 : i32
        %56 = arith.index_cast %55 : i32 to index
        %57 = memref.load %arg2[%56] : memref<64xi32, #tpu.memory_space<smem>>
        %58 = arith.index_cast %57 : i32 to index
        %c0_20 = arith.constant 0 : index
        %59 = vector.load %arg3[%58, %c0_20] : memref<64x128xf32, #tpu.memory_space<vmem>>, vector<1x128xf32>
        %60 = arith.addf %54, %59 : vector<1x128xf32>
        %cst_21 = arith.constant 1.250000e-01 : f32
        %61 = vector.broadcast %cst_21 : f32 to vector<1x128xf32>
        %62 = arith.mulf %60, %61 : vector<1x128xf32>
        %63 = arith.index_cast %arg8 : i32 to index
        %c0_22 = arith.constant 0 : index
        %64 = vector.load %arg7[%63, %c0_22] : memref<8x128xf32, #tpu.memory_space<vmem>>, vector<1x128xf32>
        tpu.vector_store %arg7[%63, %c0_22], %62 {strides = array<i32>} : memref<8x128xf32, #tpu.memory_space<vmem>>, vector<1x128xf32>,
      }
      %c8_i32_9 = arith.constant 8 : i32
    } else {
    }
    %c0 = arith.constant 0 : index
    %c0_1 = arith.constant 0 : index
    %3 = vector.load %arg7[%c0, %c0_1] : memref<8x128xf32, #tpu.memory_space<vmem>>, vector<8x128xf32>
    %4 = arith.truncf %3 : vector<8x128xf32> to vector<8x128xbf16>
    %c0_2 = arith.constant 0 : index
    %c0_3 = arith.constant 0 : index
    %5 = vector.load %arg4[%c0_2, %c0_3] : memref<128x128xbf16, #tpu.memory_space<vmem>>, vector<128x128xbf16>
    %cst = arith.constant dense<0.000000e+00> : vector<8x128xf32>
    %6 = tpu.matmul %4, %5, %cst {dimension_numbers = #tpu.dot_dimension_numbers<[1], [1], [0], [0], [0, 0, 1, 0], [], []>} : vector<8x128xbf16>, vector<128x128xbf16>, vector<8x128xf32> -> vector<8x128xf32>
    %c0_4 = arith.constant 0 : index
    %c0_5 = arith.constant 0 : index
    %7 = vector.load %arg5[%c0_4, %c0_5] : memref<1x128xf32, #tpu.memory_space<vmem>>, vector<1x128xf32>
    %8 = vector.broadcast %7 : vector<1x128xf32> to vector<8x128xf32>
    %9 = arith.addf %6, %8 : vector<8x128xf32>
    %c0_6 = arith.constant 0 : index
    %c0_7 = arith.constant 0 : index
    %10 = vector.load %arg6[%c0_6, %c0_7] : memref<8x128xf32, #tpu.memory_space<vmem>>, vector<8x128xf32>
    tpu.vector_store %arg6[%c0_6, %c0_7], %9 {strides = array<i32>} : memref<8x128xf32, #tpu.memory_space<vmem>>, vector<8x128xf32>,
    return
  }
  func.func @transform_0(%arg0: i32, %arg1: i32, %arg2: memref<64xi32, #tpu.memory_space<smem>>) -> (i32, i32) {
    %c0_i32 = arith.constant 0 : i32
    %c0_i32_0 = arith.constant 0 : i32
    %c0_i32_1 = arith.constant 0 : i32
    return %c0_i32, %c0_i32_0 : i32, i32
  }
  func.func @transform_1(%arg0: i32, %arg1: i32, %arg2: memref<64xi32, #tpu.memory_space<smem>>) -> (i32, i32) {
    %c0_i32 = arith.constant 0 : i32
    %c0_i32_0 = arith.constant 0 : i32
    return %arg1, %c0_i32 : i32, i32
  }
  func.func @transform_2(%arg0: i32, %arg1: i32, %arg2: memref<64xi32, #tpu.memory_space<smem>>) -> (i32, i32) {
    %c0_i32 = arith.constant 0 : i32
    %c0_i32_0 = arith.constant 0 : i32
    return %c0_i32, %arg1 : i32, i32
  }
  func.func @transform_3(%arg0: i32, %arg1: i32, %arg2: memref<64xi32, #tpu.memory_space<smem>>) -> (i32, i32) {
    %c0_i32 = arith.constant 0 : i32
    return %arg0, %arg1 : i32, i32
  }
}

</mosaic_0001>

<llo_original>
// kernel: tpu_custom_call.1
$region0: #{tpu_custom_call.1}
  #allocation0 [shape = 'u32[]', space=smem, size = 0x4, offset = 0x4, fixed_abs, tag = 'smem constant byte address 0x4 - core index']
  #allocation1 [shape = 'u32[144,128]{1,0:T(1,128)}', space=vmem, size = 0x12000, scoped, tag = 'internal scratch']
  #allocation2 [shape = 'f32[8,128]{1,0:T(8,128)}', space=vmem, size = 0x1000, scoped, tag = 'scratch operand']
  #allocation3 [shape = 's32[1]{0}', space=sflag, size = 0x4, scoped, tag = 'scoped memory for tpu_custom_call.1']
  #allocation4 [shape = 'u8[512]{0}', space=smem, size = 0x200, scoped, tag = 'prefetched SMEM operand 0']
  %s0 = inlined_call_operand.hbm [shape: s32[64], index: 0, kind: input, shape index: {}]
  %s1 = inlined_call_operand.hbm [shape: f32[64,128], index: 1, kind: input, shape index: {}]
  %s2 = inlined_call_operand.hbm [shape: bf16[128,128], index: 2, kind: input, shape index: {}]
  %s3 = inlined_call_operand.vmem [shape: f32[1,128], index: 3, kind: input, shape index: {}]
  %s4 = inlined_call_operand.hbm [shape: f32[8,128], index: 4, kind: output, shape index: {}]
  %s5 = sld [smem:[#allocation0]]
  $region41: #{tpu_custom_call.1} parent=0
    _
  %s7 = ssub.s32 1, %s5
  %s8 = scalar_select 0, %s7, %s5
  %10 = dma.hbm_to_smem %s0, 16, [#allocation4], [#allocation3]
  %11 = dma.done [#allocation3], 16
  %12 = sfence
  $region1: #{tpu_custom_call.1} parent=0
    #allocation5 [shape = 'u8[32768]{0}', space=vmem, size = 0x8000, scoped, tag = 'input window, operand 1, single buffered']
    #allocation6 [shape = 's32[1]{0}', space=sflag, size = 0x4, scoped, tag = 'scoped memory for tpu_custom_call.1']
    #allocation7 [shape = 's32[1]{0}', space=sflag, size = 0x4, scoped, tag = 'scoped memory for tpu_custom_call.1']
    #allocation8 [shape = 'u8[32768]{0}', space=vmem, size = 0x8000, scoped, tag = 'input window, operand 2, single buffered']
    #allocation9 [shape = 's32[1]{0}', space=sflag, size = 0x4, scoped, tag = 'scoped memory for tpu_custom_call.1']
    #allocation10 [shape = 'u8[4096]{0}', space=vmem, size = 0x1000, scoped, tag = 'output window, operand 0, single buffered']
    %13 = vsyncpa [#allocation6], 0
    %14 = vsyncpa [#allocation9], 0
    %15 = vsyncpa [#allocation7], 0
    // Predicated region
    $region2: #{tpu_custom_call.1} parent=1 // pred_check
      _
    $region3: #{tpu_custom_call.1} parent=1 // pred_check_branch
      %17 = sbr.rel (0) target = $region5
    $region4: #{tpu_custom_call.1} parent=1 // pred_region
      %s19 = ssub.s32 1024, 1024
      %20 = vsyncadd [#allocation6], %s19
      %s21 = sshll.u32 [#allocation5], 4
      %s22 = int_to_ptr.vmem [resolvable:$true] %s21
      %27 = dma.hbm_to_vmem [thread:$0]  %s1, 1024, %s22, [#allocation6], 128, 128, 8
    $region5: #{tpu_custom_call.1} parent=1 // pred_fallthru
      _
    // Predicated region
    $region6: #{tpu_custom_call.1} parent=1 // pred_check
      _
    $region7: #{tpu_custom_call.1} parent=1 // pred_check_branch
      %29 = sbr.rel (0) target = $region9
    $region8: #{tpu_custom_call.1} parent=1 // pred_region
      %s31 = ssub.s32 1024, 1024
      %32 = vsyncadd [#allocation9], %s31
      %s33 = sshll.u32 [#allocation8], 4
      %s34 = int_to_ptr.vmem [resolvable:$true] %s33
      %39 = dma.hbm_to_vmem [thread:$0]  %s2, 1024, %s34, [#allocation9], 64, 64, 4
    $region9: #{tpu_custom_call.1} parent=1 // pred_fallthru
      _
    // Predicated region
    $region10: #{tpu_custom_call.1} parent=1 // pred_check
      _
    $region11: #{tpu_custom_call.1} parent=1 // pred_check_branch
      %41 = sbr.rel (0) target = $region13
    $region12: #{tpu_custom_call.1} parent=1 // pred_region
      _
    $region13: #{tpu_custom_call.1} parent=1 // pred_fallthru
      _
    // Predicated region
    $region14: #{tpu_custom_call.1} parent=1 // pred_check
      _
    $region15: #{tpu_custom_call.1} parent=1 // pred_check_branch
      %43 = sbr.rel (0) target = $region17
    $region16: #{tpu_custom_call.1} parent=1 // pred_region
      %44 = dma.done [#allocation6], 1024
    $region17: #{tpu_custom_call.1} parent=1 // pred_fallthru
      _
    // Predicated region
    $region18: #{tpu_custom_call.1} parent=1 // pred_check
      _
    $region19: #{tpu_custom_call.1} parent=1 // pred_check_branch
      %46 = sbr.rel (0) target = $region21
    $region20: #{tpu_custom_call.1} parent=1 // pred_region
      %47 = dma.done [#allocation9], 1024
    $region21: #{tpu_custom_call.1} parent=1 // pred_fallthru
      _
    %p49 = scmp.eq.s32.totalorder 0, 0
    // Predicated region
    $region22: #{tpu_custom_call.1} parent=1 // pred_check
      %p50 = pneg %p49
    $region23: #{tpu_custom_call.1} parent=1 // pred_check_branch
      %52 = sbr.rel (%p50) target = $region25
    $region24: #{tpu_custom_call.1} parent=1 // pred_region
      loop: start=0, step=1, limit=8
      $region26: #{tpu_custom_call.1} parent=24 // loop_pre_header
        _
      $region27: #{tpu_custom_call.1} parent=24 // loop_header
        %s54 = sphi 0, %s58
        %p55 = scmp.ge.s32.totalorder %s54, 8
      $region28: #{tpu_custom_call.1} parent=24 // loop_header_branch
        %57 = sbr.rel (%p55) target = $region32
      $region29: #{tpu_custom_call.1} parent=24 // loop_body
        %s59 = smul.u32 0, 8
        %s60 = sadd.s32 %s59, %s54
        %s61 = smul.u32 %s60, 8
        %s62 = sld [smem:[#allocation4 + %s61]]
        %s63 = scalar_lea.vmem [#allocation5], %s62
        %v64 = vld [vmem:[%s63] sm:$0x1]
        %s65 = sadd.s32 %s61, 1
        %s66 = sld [smem:[#allocation4 + %s65]]
        %s67 = scalar_lea.vmem [#allocation5], %s66
        %v68 = vld [vmem:[%s67] sm:$0x1]
        %v69 = vadd.f32 %v64, %v68
        %s70 = sadd.s32 %s61, 2
        %s71 = sld [smem:[#allocation4 + %s70]]
        %s72 = scalar_lea.vmem [#allocation5], %s71
        %v73 = vld [vmem:[%s72] sm:$0x1]
        %v74 = vadd.f32 %v69, %v73
        %s75 = sadd.s32 %s61, 3
        %s76 = sld [smem:[#allocation4 + %s75]]
        %s77 = scalar_lea.vmem [#allocation5], %s76
        %v78 = vld [vmem:[%s77] sm:$0x1]
        %v79 = vadd.f32 %v74, %v78
        %s80 = sadd.s32 %s61, 4
        %s81 = sld [smem:[#allocation4 + %s80]]
        %s82 = scalar_lea.vmem [#allocation5], %s81
        %v83 = vld [vmem:[%s82] sm:$0x1]
        %v84 = vadd.f32 %v79, %v83
        %s85 = sadd.s32 %s61, 5
        %s86 = sld [smem:[#allocation4 + %s85]]
        %s87 = scalar_lea.vmem [#allocation5], %s86
        %v88 = vld [vmem:[%s87] sm:$0x1]
        %v89 = vadd.f32 %v84, %v88
        %s90 = sadd.s32 %s61, 6
        %s91 = sld [smem:[#allocation4 + %s90]]
        %s92 = scalar_lea.vmem [#allocation5], %s91
        %v93 = vld [vmem:[%s92] sm:$0x1]
        %v94 = vadd.f32 %v89, %v93
        %s95 = sadd.s32 %s61, 7
        %s96 = sld [smem:[#allocation4 + %s95]]
        %s97 = scalar_lea.vmem [#allocation5], %s96
        %v98 = vld [vmem:[%s97] sm:$0x1]
        %v99 = vadd.f32 %v94, %v98
        %v100 = vmul.f32 %v99, 0.125
        %s101 = scalar_lea.vmem [#allocation2], %s54
        %102 = vst [vmem:[%s101] sm:$0x1] %v100
      $region30: #{tpu_custom_call.1} parent=24 // loop_footer
        %s58 = sadd.s32 1, %s54
      $region31: #{tpu_custom_call.1} parent=24 // loop_footer_branch
        %53 = sbr.rel target = $region27
      $region32: #{tpu_custom_call.1} parent=24 // loop_exit
        _
    $region25: #{tpu_custom_call.1} parent=1 // pred_fallthru
      _
    %v103 = vld [vmem:[#allocation2] sm:$0xff]
    %v104 = vpack.c.bf16 %v103, %v103
    %v105 = vld [vmem:[#allocation8] sm:$0xf]
    %v106 = vld [vmem:[#allocation8 + $0x4] sm:$0xf]
    %v107 = vld [vmem:[#allocation8 + $0x8] sm:$0xf]
    %v108 = vld [vmem:[#allocation8 + $0xc] sm:$0xf]
    %v109 = vld [vmem:[#allocation8 + $0x10] sm:$0xf]
    %v110 = vld [vmem:[#allocation8 + $0x14] sm:$0xf]
    %v111 = vld [vmem:[#allocation8 + $0x18] sm:$0xf]
    %v112 = vld [vmem:[#allocation8 + $0x1c] sm:$0xf]
    %v113 = vld [vmem:[#allocation8 + $0x20] sm:$0xf]
    %v114 = vld [vmem:[#allocation8 + $0x24] sm:$0xf]
    %v115 = vld [vmem:[#allocation8 + $0x28] sm:$0xf]
    %v116 = vld [vmem:[#allocation8 + $0x2c] sm:$0xf]
    %v117 = vld [vmem:[#allocation8 + $0x30] sm:$0xf]
    %v118 = vld [vmem:[#allocation8 + $0x34] sm:$0xf]
    %v119 = vld [vmem:[#allocation8 + $0x38] sm:$0xf]
    %v120 = vld [vmem:[#allocation8 + $0x3c] sm:$0xf]
    %v121 = vld [vmem:[%s3] sm:$0x1]
    %v123 = vlaneseq
    %v124 = vshrl.u32 %v123, 7
    %v125 = vsub.s32 0, %v124
    %v126 = vrot.slane %v121, %v125
    %v144 = vunpack.c.l.b16 %v105
    %v145 = vunpack.c.l.b16 %v106
    %v146 = vunpack.c.l.b16 %v107
    %v147 = vunpack.c.l.b16 %v108
    %v148 = vunpack.c.l.b16 %v109
    %v149 = vunpack.c.l.b16 %v110
    %v150 = vunpack.c.l.b16 %v111
    %v151 = vunpack.c.l.b16 %v112
    %v152 = vunpack.c.l.b16 %v113
    %v153 = vunpack.c.l.b16 %v114
    %v154 = vunpack.c.l.b16 %v115
    %v155 = vunpack.c.l.b16 %v116
    %v156 = vunpack.c.l.b16 %v117
    %v157 = vunpack.c.l.b16 %v118
    %v158 = vunpack.c.l.b16 %v119
    %v159 = vunpack.c.l.b16 %v120
    %v160 = vpack.c.b16 %v145, %v144
    %v161 = vpack.c.b16 %v147, %v146
    %v162 = vpack.c.b16 %v149, %v148
    %v163 = vpack.c.b16 %v151, %v150
    %v164 = vpack.c.b16 %v153, %v152
    %v165 = vpack.c.b16 %v155, %v154
    %v166 = vpack.c.b16 %v157, %v156
    %v167 = vpack.c.b16 %v159, %v158
    %176 = vmatprep.subr.bf16.mxu0 0
    %177 = vmatpush1.bf16.xpose.msra.mxu0 %v167
    %178 = vmatprep.subr.bf16.mxu0 0
    %179 = vmatpush1.bf16.xpose.msra.mxu0 %v166
    %180 = vmatprep.subr.bf16.mxu0 0
    %181 = vmatpush1.bf16.xpose.msra.mxu0 %v165
    %182 = vmatprep.subr.bf16.mxu0 0
    %183 = vmatpush1.bf16.xpose.msra.mxu0 %v164
    %184 = vmatprep.subr.bf16.mxu0 0
    %185 = vmatpush1.bf16.xpose.msra.mxu0 %v163
    %186 = vmatprep.subr.bf16.mxu0 0
    %187 = vmatpush1.bf16.xpose.msra.mxu0 %v162
    %188 = vmatprep.subr.bf16.mxu0 0
    %189 = vmatpush1.bf16.xpose.msra.mxu0 %v161
    %190 = vmatprep.subr.bf16.mxu0 0
    %191 = vmatpush1.bf16.xpose.msra.mxu0 %v160
    %192 = vmatprep.subr.bf16.mxu0 0
    %193 = vmatpush2.bf16.xpose.msra.mxu0 0
    %194 = vmatprep.subr.bf16.mxu0 0
    %195 = vmatpush2.bf16.xpose.msra.mxu0 0
    %196 = vmatprep.subr.bf16.mxu0 0
    %197 = vmatpush2.bf16.xpose.msra.mxu0 0
    %198 = vmatprep.subr.bf16.mxu0 0
    %199 = vmatpush2.bf16.xpose.msra.mxu0 0
    %200 = vmatprep.subr.bf16.mxu0 0
    %201 = vmatpush2.bf16.xpose.msra.mxu0 0
    %202 = vmatprep.subr.bf16.mxu0 0
    %203 = vmatpush2.bf16.xpose.msra.mxu0 0
    %204 = vmatprep.subr.bf16.mxu0 0
    %205 = vmatpush2.bf16.xpose.msra.mxu0 0
    %206 = vmatprep.subr.bf16.mxu0 0
    %207 = vmatpush2.bf16.xpose.msra.mxu0 0
    %208 = vmatprep.mubr.bf16.mxu0 0
    %209 = vmatmul.mubr.bf16.gmra.mxu0 %v104
    %v210 = vpop.f32.mrf.mxu0
    %v211 = vadd.f32 %v126, %v210
    %v212 = vpop.f32.mrf.mxu0
    %v213 = vpop.f32.mrf.mxu0
    %v214 = vpop.f32.mrf.mxu0
    %215 = vdwg.mxu0
    %216 = vst [vmem:[#allocation10] sm:$0xff] %v211
    // Predicated region
    $region33: #{tpu_custom_call.1} parent=1 // pred_check
      _
    $region34: #{tpu_custom_call.1} parent=1 // pred_check_branch
      %218 = sbr.rel (0) target = $region36
    $region35: #{tpu_custom_call.1} parent=1 // pred_region
      %s220 = ssub.s32 128, 128
      %221 = vsyncadd [#allocation7], %s220
      %s223 = sshll.u32 [#allocation10], 4
      %s224 = int_to_ptr.vmem [resolvable:$true] %s223
      %226 = dma.vmem_to_hbm [thread:$0]  %s224, 128, %s4, [#allocation7]
    $region36: #{tpu_custom_call.1} parent=1 // pred_fallthru
      _
    // Predicated region
    $region37: #{tpu_custom_call.1} parent=1 // pred_check
      _
    $region38: #{tpu_custom_call.1} parent=1 // pred_check_branch
      %228 = sbr.rel (0) target = $region40
    $region39: #{tpu_custom_call.1} parent=1 // pred_region
      %229 = dma.done [#allocation7], 128
    $region40: #{tpu_custom_call.1} parent=1 // pred_fallthru
      _
    %230 = vsyncpa [#allocation6], 1
    %231 = vsyncpa [#allocation9], 1
    %232 = vsyncpa [#allocation7], 1

</llo_original>
